<compile_context>
chip_gen: v6e
topology: v6e:2x2x1
jax: 0.10.0
libtpu: 0.0.40
codegen_flags: <defaults>
</compile_context>

<pallas_src>
import functools
import math

import jax
import jax.numpy as jnp
from jax import lax
from jax.experimental import pallas as pl
from jax.experimental.pallas import tpu as pltpu


def _round_up(x, m):
    return (x + m - 1) // m * m


def _derive_vmem_limit():
    """Chip-aware scoped-VMEM request (leave headroom for compiler scratch)."""
    cap = 128 * 1024 * 1024
    try:
        cap = int(pltpu.get_tpu_info().vmem_capacity_bytes)
    except Exception:
        pass
    return int(min(max(cap - 16 * 1024 * 1024, 32 * 1024 * 1024),
                   100 * 1024 * 1024))


# ----------------------------------------------------------------------------
# Kernel 1: row-tiled linear projection  y = x @ W   (nn.Linear(bias=False)).
#           x is (M, Din), tiled along M; bf16 MXU operands, f32 accumulation.
# ----------------------------------------------------------------------------
def _linear_kernel(x_ref, w_ref, o_ref):
    o_ref[...] = jnp.dot(
        x_ref[...].astype(jnp.bfloat16),
        w_ref[...].astype(jnp.bfloat16),
        preferred_element_type=jnp.float32,
    ).astype(o_ref.dtype)


def pallas_linear(x2, w, *, vmem_limit, out_dtype=None):
    M, Din = x2.shape
    Dout = w.shape[1]
    out_dtype = out_dtype or x2.dtype

    tm = 512 if M >= 512 else _round_up(M, 8)
    Mp = _round_up(M, tm)
    if Mp != M:
        x2 = jnp.pad(x2, ((0, Mp - M), (0, 0)))

    y = pl.pallas_call(
        _linear_kernel,
        out_shape=jax.ShapeDtypeStruct((Mp, Dout), out_dtype),
        grid_spec=pltpu.PrefetchScalarGridSpec(
            num_scalar_prefetch=0,
            grid=(Mp // tm,),
            in_specs=[
                pl.BlockSpec((tm, Din), lambda i: (i, 0)),
                pl.BlockSpec((Din, Dout), lambda i: (0, 0)),   # weight resident
            ],
            out_specs=pl.BlockSpec((tm, Dout), lambda i: (i, 0)),
        ),
        compiler_params=pltpu.CompilerParams(
            dimension_semantics=("parallel",),
            vmem_limit_bytes=vmem_limit,
        ),
    )(x2, w)
    return y[:M] if Mp != M else y


# ----------------------------------------------------------------------------
# Kernel 2: per-(batch, head) attention with fused 1x1-conv channel mixing and
#           fused output (fc) projection accumulated across heads.
# ----------------------------------------------------------------------------
def _mha_attn_kernel(conv_ref, fc_ref, q_ref, k_ref, v_ref,
                     mask_ref, adj_ref, dist_ref, *rest, d_k, with_attn):
    if with_attn:
        out_ref, attn_ref, nmask_scr, bias_scr = rest
    else:
        out_ref, nmask_scr, bias_scr = rest
        attn_ref = None

    h = pl.program_id(1)

    # Head-invariant S^2 work: computed once per batch (h == 0), reused by all
    # heads via persistent VMEM scratch.  mask/adj/dist block indices are
    # constant across h so they are DMA'd once per batch as well.
    @pl.when(h == 0)
    def _():
        maskb = mask_ref[0] != 0                              # True = masked out
        adj = adj_ref[0].astype(jnp.float32)
        dist = dist_ref[0].astype(jnp.float32)
        w1 = conv_ref[1]
        w2 = conv_ref[2]
        cb = conv_ref[3]
        # dist.masked_fill(mask, +inf); exp(-x)  ==  where(mask, 0, exp(-dist))
        dist_k = jnp.where(maskb, 0.0, jnp.exp(-dist))
        nmask_scr[...] = jnp.where(maskb, -1e9, 0.0)          # additive mask
        bias_scr[...] = jnp.where(maskb, -1e9, w1 * dist_k + w2 * adj + cb)
        out_ref[...] = jnp.zeros_like(out_ref)

    qh = q_ref[0, 0]                                          # (S, d_k) bf16
    kh = k_ref[0, 0]
    vh = v_ref[0, 0]

    # scores = (q @ k^T) / sqrt(d_k) without materializing a K transpose.
    scale = 1.0 / math.sqrt(d_k)
    s = lax.dot_general(qh, kh, (((1,), (1,)), ((), ())),
                        preferred_element_type=jnp.float32) * scale
    s = s + nmask_scr[...]

    # First (intermediate) softmax: approx reciprocal rides the EUP slot.
    m1 = jnp.max(s, axis=-1, keepdims=True)
    e1 = jnp.exp(s - m1)
    p = e1 * pl.reciprocal(jnp.sum(e1, axis=-1, keepdims=True), approx=True)

    # 1x1 Conv2d(3->1): w0*scores + w1*dist_k + w2*adj + cb, then mask fill.
    weighted = conv_ref[0] * p + bias_scr[...]

    # Second softmax is a module output -> exact divide.
    m2 = jnp.max(weighted, axis=-1, keepdims=True)
    e2 = jnp.exp(weighted - m2)
    a = e2 / jnp.sum(e2, axis=-1, keepdims=True)

    if with_attn:
        attn_ref[0, 0] = a.astype(attn_ref.dtype)

    # context_h = a @ V_h, immediately folded through fc_h and accumulated into
    # the lane-dense (S, d_model) output block (fc fused -> no ctx HBM trip).
    ctx_h = jnp.dot(a.astype(jnp.bfloat16), vh,
                    preferred_element_type=jnp.float32)
    contrib = jnp.dot(ctx_h.astype(jnp.bfloat16), fc_ref[0],
                      preferred_element_type=jnp.float32)
    out_ref[0] += contrib


def pallas_attention_core(conv, fc_heads, q, k, v, mask_i8, adj, dist, *,
                          n_heads, d_k, d_model, vmem_limit, with_attn=True):
    B, _, S, _ = q.shape
    kernel = functools.partial(_mha_attn_kernel, d_k=d_k, with_attn=with_attn)

    out_shapes = [jax.ShapeDtypeStruct((B, S, d_model), jnp.float32)]
    out_specs = [pl.BlockSpec((1, S, d_model), lambda b, h: (b, 0, 0))]
    if with_attn:
        out_shapes.append(jax.ShapeDtypeStruct((B, n_heads, S, S), jnp.float32))
        out_specs.append(pl.BlockSpec((1, 1, S, S), lambda b, h: (b, h, 0, 0)))

    results = pl.pallas_call(
        kernel,
        out_shape=tuple(out_shapes),
        grid_spec=pltpu.PrefetchScalarGridSpec(
            num_scalar_prefetch=0,
            grid=(B, n_heads),
            in_specs=[
                pl.BlockSpec(memory_space=pltpu.MemorySpace.SMEM),       # conv (4,)
                pl.BlockSpec((1, d_k, d_model), lambda b, h: (h, 0, 0)), # fc_h bf16
                pl.BlockSpec((1, 1, S, d_k), lambda b, h: (b, h, 0, 0)), # Q_h bf16
                pl.BlockSpec((1, 1, S, d_k), lambda b, h: (b, h, 0, 0)), # K_h bf16
                pl.BlockSpec((1, 1, S, d_k), lambda b, h: (b, h, 0, 0)), # V_h bf16
                pl.BlockSpec((1, S, S), lambda b, h: (b, 0, 0)),         # mask int8
                pl.BlockSpec((1, S, S), lambda b, h: (b, 0, 0)),         # adj bf16
                pl.BlockSpec((1, S, S), lambda b, h: (b, 0, 0)),         # dist bf16
            ],
            out_specs=tuple(out_specs),
            scratch_shapes=[
                pltpu.VMEM((S, S), jnp.float32),   # additive mask (0 / -1e9)
                pltpu.VMEM((S, S), jnp.float32),   # masked conv bias
            ],
        ),
        compiler_params=pltpu.CompilerParams(
            dimension_semantics=("parallel", "arbitrary"),
            vmem_limit_bytes=vmem_limit,
        ),
    )(conv, fc_heads, q, k, v, mask_i8, adj, dist)

    if with_attn:
        return results[0], results[1]
    return results[0], None


# ----------------------------------------------------------------------------
# MultiHeadAttention forward (enc_dec_flag=True, softmax activation, exp kernel)
# ----------------------------------------------------------------------------
def multi_head_attention(params, input_Q, input_K, input_V, attn_mask,
                         adj_matrix, dist_matrix, n_heads, return_attn=True):
    B, S, d_model = input_Q.shape
    d_k = d_model // n_heads
    vmem_limit = _derive_vmem_limit()

    if (input_K is input_Q) and (input_V is input_Q):
        # Self-attention: fused QKV projection with concatenated weight.
        w_qkv = jnp.concatenate([params["W_Q"], params["W_K"], params["W_V"]],
                                axis=1)                         # (d_model, 3*d_model)
        qkv = pallas_linear(input_Q.reshape(B * S, d_model), w_qkv,
                            vmem_limit=vmem_limit, out_dtype=jnp.bfloat16)
        qkv = qkv.reshape(B, S, 3, n_heads, d_k)
        q = qkv[:, :, 0].transpose(0, 2, 1, 3)                  # (B, H, S, d_k)
        k = qkv[:, :, 1].transpose(0, 2, 1, 3)
        v = qkv[:, :, 2].transpose(0, 2, 1, 3)
    else:
        # Cross-attention fallback: separate projections.
        def proj(x, w):
            y = pallas_linear(x.reshape(B * S, d_model), w,
                              vmem_limit=vmem_limit, out_dtype=jnp.bfloat16)
            return y.reshape(B, S, n_heads, d_k).transpose(0, 2, 1, 3)
        q = proj(input_Q, params["W_Q"])
        k = proj(input_K, params["W_K"])
        v = proj(input_V, params["W_V"])

    mask_i8 = attn_mask.astype(jnp.int8)                        # compact S^2 stream
    adj_bf = adj_matrix.astype(jnp.bfloat16)
    dist_bf = dist_matrix.astype(jnp.bfloat16)
    fc_heads = params["fc"].reshape(n_heads, d_k, d_model).astype(jnp.bfloat16)
    conv = params["conv"].astype(jnp.float32)

    output, attn = pallas_attention_core(
        conv, fc_heads, q, k, v, mask_i8, adj_bf, dist_bf,
        n_heads=n_heads, d_k=d_k, d_model=d_model,
        vmem_limit=vmem_limit, with_attn=return_attn)
    return output, attn


# ----------------------------------------------------------------------------
# Pure-JAX reference for verification
# ----------------------------------------------------------------------------
def reference(params, iq, ik, iv, mask, adj, dist, n_heads):
    B, S, d_model = iq.shape
    d_k = d_model // n_heads
    Q = (iq @ params["W_Q"]).reshape(B, S, n_heads, d_k).transpose(0, 2, 1, 3)
    K = (ik @ params["W_K"]).reshape(B, S, n_heads, d_k).transpose(0, 2, 1, 3)
    V = (iv @ params["W_V"]).reshape(B, S, n_heads, d_k).transpose(0, 2, 1, 3)

    mask4 = mask[:, None, :, :]
    scores = jnp.einsum("bhqd,bhkd->bhqk", Q, K) / math.sqrt(d_k)
    scores = jnp.where(mask4, -1e9, scores)
    scores = jax.nn.softmax(scores, axis=-1)

    dist_k = jnp.where(mask, 0.0, jnp.exp(-dist))[:, None, :, :]
    adj4 = adj[:, None, :, :]
    c = params["conv"]
    weighted = c[0] * scores + c[1] * dist_k + c[2] * adj4 + c[3]
    weighted = jnp.where(mask4, -1e9, weighted)
    attn = jax.nn.softmax(weighted, axis=-1)

    ctx = jnp.einsum("bhqk,bhkd->bhqd", attn, V)
    ctx = ctx.transpose(0, 2, 1, 3).reshape(B, S, n_heads * d_k)
    return ctx @ params["fc"], attn


if __name__ == "__main__":
    B, S, d_model, n_heads = 2, 8, 32, 4
    key = jax.random.PRNGKey(0)
    ks = jax.random.split(key, 10)

    scale = 1.0 / math.sqrt(d_model)
    params = {
        "W_Q": jax.random.normal(ks[0], (d_model, d_model), jnp.float32) * scale,
        "W_K": jax.random.normal(ks[1], (d_model, d_model), jnp.float32) * scale,
        "W_V": jax.random.normal(ks[2], (d_model, d_model), jnp.float32) * scale,
        "fc":  jax.random.normal(ks[3], (d_model, d_model), jnp.float32) * scale,
        # 1x1 conv (3->1 channels): 3 channel weights + bias, flattened to (4,)
        "conv": jax.random.normal(ks[4], (4,), jnp.float32) * 0.5,
    }

    input_Q = jax.random.normal(ks[5], (B, S, d_model), jnp.float32)
    input_K = input_Q  # self-attention style inputs
    input_V = input_Q
    attn_mask = jax.random.bernoulli(ks[6], 0.3, (B, S, S))
    attn_mask = attn_mask.at[:, :, 0].set(False)  # keep >=1 valid key per row
    adj_matrix = jax.random.bernoulli(ks[7], 0.4, (B, S, S)).astype(jnp.float32)
    dist_matrix = jax.random.uniform(ks[8], (B, S, S), jnp.float32, 0.1, 3.0)

    out, attn = multi_head_attention(params, input_Q, input_K, input_V,
                                     attn_mask, adj_matrix, dist_matrix, n_heads)
    out = jax.block_until_ready(out)
    attn = jax.block_until_ready(attn)

    ref_out, ref_attn = reference(params, input_Q, input_K, input_V,
                                  attn_mask, adj_matrix, dist_matrix, n_heads)

    assert out.shape == (B, S, d_model)
    assert attn.shape == (B, n_heads, S, S)
    # Tolerances account for bf16 MXU operands (f32 accumulation) and the
    # approximate EUP reciprocal in the intermediate softmax.
    assert jnp.allclose(out, ref_out, rtol=5e-2, atol=5e-2), \
        float(jnp.max(jnp.abs(out - ref_out)))
    assert jnp.allclose(attn, ref_attn, rtol=3e-2, atol=3e-2), \
        float(jnp.max(jnp.abs(attn - ref_attn)))
    print("KERNEL_OK")
</pallas_src>

<mosaic_0001>
module attributes {stable_mosaic.version = 11 : i64} {
  func.func @_linear_kernel(%arg0: i32, %arg1: memref<16x32xf32, #tpu.memory_space<vmem>>, %arg2: memref<32x96xf32, #tpu.memory_space<vmem>>, %arg3: memref<16x96xbf16, #tpu.memory_space<vmem>>) attributes {dimension_semantics = [#tpu.dimension_semantics<parallel>], iteration_bounds = array<i64: 1>, scalar_prefetch = 0 : i64, scratch_operands = 0 : i64, tpu.core_type = #tpu.core_type<tc>, window_params = [{transform_indices = @transform_0, window_bounds = array<i64: 16, 32>}, {pipeline_mode = #tpu.pipeline_mode<synchronous>, transform_indices = @transform_1, window_bounds = array<i64: 32, 96>}, {transform_indices = @transform_2, window_bounds = array<i64: 16, 96>}]} {
    %c0 = arith.constant 0 : index
    %c0_0 = arith.constant 0 : index
    %0 = vector.load %arg1[%c0, %c0_0] : memref<16x32xf32, #tpu.memory_space<vmem>>, vector<16x32xf32>
    %1 = arith.truncf %0 : vector<16x32xf32> to vector<16x32xbf16>
    %c0_1 = arith.constant 0 : index
    %c0_2 = arith.constant 0 : index
    %2 = vector.load %arg2[%c0_1, %c0_2] : memref<32x96xf32, #tpu.memory_space<vmem>>, vector<32x96xf32>
    %3 = arith.truncf %2 : vector<32x96xf32> to vector<32x96xbf16>
    %cst = arith.constant dense<0.000000e+00> : vector<16x96xf32>
    %4 = tpu.matmul %1, %3, %cst {dimension_numbers = #tpu.dot_dimension_numbers<[1], [0], [0], [1], [0, 0, 1, 1], [], []>} : vector<16x32xbf16>, vector<32x96xbf16>, vector<16x96xf32> -> vector<16x96xf32>
    %5 = arith.truncf %4 : vector<16x96xf32> to vector<16x96xbf16>
    %c0_3 = arith.constant 0 : index
    %c0_4 = arith.constant 0 : index
    %6 = vector.load %arg3[%c0_3, %c0_4] : memref<16x96xbf16, #tpu.memory_space<vmem>>, vector<16x96xbf16>
    tpu.vector_store %arg3[%c0_3, %c0_4], %5 {strides = array<i32>} : memref<16x96xbf16, #tpu.memory_space<vmem>>, vector<16x96xbf16>,
    return
  }
  func.func @transform_0(%arg0: i32) -> (i32, i32) {
    %c0_i32 = arith.constant 0 : i32
    %c0_i32_0 = arith.constant 0 : i32
    return %arg0, %c0_i32 : i32, i32
  }
  func.func @transform_1(%arg0: i32) -> (i32, i32) {
    %c0_i32 = arith.constant 0 : i32
    %c0_i32_0 = arith.constant 0 : i32
    %c0_i32_1 = arith.constant 0 : i32
    return %c0_i32, %c0_i32_0 : i32, i32
  }
  func.func @transform_2(%arg0: i32) -> (i32, i32) {
    %c0_i32 = arith.constant 0 : i32
    %c0_i32_0 = arith.constant 0 : i32
    return %arg0, %c0_i32 : i32, i32
  }
}

</mosaic_0001>

<llo_original>
// kernel: tpu_custom_call.1
$region0: #{tpu_custom_call.1}
  #allocation0 [shape = 'u32[]', space=smem, size = 0x4, offset = 0x4, fixed_abs, tag = 'smem constant byte address 0x4 - core index']
  #allocation1 [shape = 'u32[144,128]{1,0:T(1,128)}', space=vmem, size = 0x12000, scoped, tag = 'internal scratch']
  %s0 = inlined_call_operand.hbm [shape: f32[16,32], index: 0, kind: input, shape index: {}]
  %s1 = inlined_call_operand.hbm [shape: f32[32,96], index: 1, kind: input, shape index: {}]
  %s2 = inlined_call_operand.hbm [shape: bf16[16,96], index: 2, kind: output, shape index: {}]
  %s3 = sld [smem:[#allocation0]]
  $region26: #{tpu_custom_call.1} parent=0
    _
  %s5 = ssub.s32 1, %s3
  %s6 = scalar_select 0, %s5, %s3
  $region1: #{tpu_custom_call.1} parent=0
    #allocation2 [shape = 'u8[8192]{0}', space=vmem, size = 0x2000, scoped, tag = 'input window, operand 0, single buffered']
    #allocation3 [shape = 's32[1]{0}', space=sflag, size = 0x4, scoped, tag = 'scoped memory for tpu_custom_call.1']
    #allocation4 [shape = 's32[1]{0}', space=sflag, size = 0x4, scoped, tag = 'scoped memory for tpu_custom_call.1']
    #allocation5 [shape = 'u8[16384]{0}', space=vmem, size = 0x4000, scoped, tag = 'input window, operand 1, single buffered']
    #allocation6 [shape = 's32[1]{0}', space=sflag, size = 0x4, scoped, tag = 'scoped memory for tpu_custom_call.1']
    #allocation7 [shape = 'u8[4096]{0}', space=vmem, size = 0x1000, scoped, tag = 'output window, operand 0, single buffered']
    %7 = vsyncpa [#allocation3], 0
    %8 = vsyncpa [#allocation6], 0
    %9 = vsyncpa [#allocation4], 0
    // Predicated region
    $region2: #{tpu_custom_call.1} parent=1 // pred_check
      _
    $region3: #{tpu_custom_call.1} parent=1 // pred_check_branch
      %11 = sbr.rel (0) target = $region5
    $region4: #{tpu_custom_call.1} parent=1 // pred_region
      %s13 = ssub.s32 256, 256
      %14 = vsyncadd [#allocation3], %s13
      %s15 = sshll.u32 [#allocation2], 4
      %s16 = int_to_ptr.vmem [resolvable:$true] %s15
      %21 = dma.hbm_to_vmem [thread:$0]  %s0, 256, %s16, [#allocation3], 128, 128, 8
    $region5: #{tpu_custom_call.1} parent=1 // pred_fallthru
      _
    // Predicated region
    $region6: #{tpu_custom_call.1} parent=1 // pred_check
      _
    $region7: #{tpu_custom_call.1} parent=1 // pred_check_branch
      %23 = sbr.rel (0) target = $region9
    $region8: #{tpu_custom_call.1} parent=1 // pred_region
      %s25 = ssub.s32 512, 512
      %26 = vsyncadd [#allocation6], %s25
      %s27 = sshll.u32 [#allocation5], 4
      %s28 = int_to_ptr.vmem [resolvable:$true] %s27
      %33 = dma.hbm_to_vmem [thread:$0]  %s1, 512, %s28, [#allocation6], 128, 128, 8
    $region9: #{tpu_custom_call.1} parent=1 // pred_fallthru
      _
    // Predicated region
    $region10: #{tpu_custom_call.1} parent=1 // pred_check
      _
    $region11: #{tpu_custom_call.1} parent=1 // pred_check_branch
      %35 = sbr.rel (0) target = $region13
    $region12: #{tpu_custom_call.1} parent=1 // pred_region
      %36 = dma.done [#allocation3], 256
    $region13: #{tpu_custom_call.1} parent=1 // pred_fallthru
      _
    // Predicated region
    $region14: #{tpu_custom_call.1} parent=1 // pred_check
      _
    $region15: #{tpu_custom_call.1} parent=1 // pred_check_branch
      %38 = sbr.rel (0) target = $region17
    $region16: #{tpu_custom_call.1} parent=1 // pred_region
      %39 = dma.done [#allocation6], 512
    $region17: #{tpu_custom_call.1} parent=1 // pred_fallthru
      _
    %v41 = vld [vmem:[#allocation2] sm:$0xff]
    %v42 = vld [vmem:[#allocation2 + $0x8] sm:$0xff]
    %v43 = vpack.c.bf16 %v42, %v41
    %v44 = vld [vmem:[#allocation5] sm:$0xff]
    %v45 = vld [vmem:[#allocation5 + $0x8] sm:$0xff]
    %v46 = vld [vmem:[#allocation5 + $0x10] sm:$0xff]
    %v47 = vld [vmem:[#allocation5 + $0x18] sm:$0xff]
    %v48 = vpack.c.bf16 %v45, %v44
    %v49 = vpack.c.bf16 %v47, %v46
    %vm50 = vcmask 261120
    %v52 = vsel %vm50, %v43, 0
    %54 = vmatprep.subr.bf16.mxu0 0
    %55 = vmatpush1.bf16.msra.mxu0 0
    %56 = vmatprep.subr.bf16.mxu0 0
    %57 = vmatpush1.bf16.msra.mxu0 0
    %58 = vmatprep.subr.bf16.mxu0 0
    %59 = vmatpush1.bf16.msra.mxu0 0
    %60 = vmatprep.subr.bf16.mxu0 0
    %61 = vmatpush1.bf16.msra.mxu0 0
    %62 = vmatprep.subr.bf16.mxu0 0
    %63 = vmatpush1.bf16.msra.mxu0 0
    %64 = vmatprep.subr.bf16.mxu0 0
    %65 = vmatpush1.bf16.msra.mxu0 0
    %66 = vmatprep.subr.bf16.mxu0 0
    %67 = vmatpush1.bf16.msra.mxu0 %v49
    %68 = vmatprep.subr.bf16.mxu0 0
    %69 = vmatpush1.bf16.msra.mxu0 %v48
    %70 = vmatprep.subr.bf16.mxu0 0
    %71 = vmatpush2.bf16.msra.mxu0 0
    %72 = vmatprep.subr.bf16.mxu0 0
    %73 = vmatpush2.bf16.msra.mxu0 0
    %74 = vmatprep.subr.bf16.mxu0 0
    %75 = vmatpush2.bf16.msra.mxu0 0
    %76 = vmatprep.subr.bf16.mxu0 0
    %77 = vmatpush2.bf16.msra.mxu0 0
    %78 = vmatprep.subr.bf16.mxu0 0
    %79 = vmatpush2.bf16.msra.mxu0 0
    %80 = vmatprep.subr.bf16.mxu0 0
    %81 = vmatpush2.bf16.msra.mxu0 0
    %82 = vmatprep.subr.bf16.mxu0 0
    %83 = vmatpush2.bf16.msra.mxu0 0
    %84 = vmatprep.subr.bf16.mxu0 0
    %85 = vmatpush2.bf16.msra.mxu0 0
    %86 = vmatprep.mubr.bf16.mxu0 0
    %87 = vmatmul.mubr.bf16.gmra.mxu0 %v52
    %v88 = vpop.f32.mrf.mxu0
    %v89 = vadd.f32 0.0, %v88
    %v90 = vpop.f32.mrf.mxu0
    %v91 = vpop.f32.mrf.mxu0
    %v92 = vadd.f32 0.0, %v91
    %v93 = vpop.f32.mrf.mxu0
    %94 = vdwg.mxu0
    %v95 = vpack.c.bf16 %v92, %v89
    %v97 = vunpack.c.l.b16 %v95
    %v98 = vunpack.c.h.b16 %v95
    %v99 = vpack.c.b16 %v97, %v97
    %v100 = vpack.c.b16 %v98, %v98
    %vm103 = vcmask 781312
    %104 = vst.msk [vmem:[#allocation7] sm:$0xf] %vm103, %v99
    %105 = vst.msk [vmem:[#allocation7 + $0x4] sm:$0xf] %vm103, %v100
    // Predicated region
    $region18: #{tpu_custom_call.1} parent=1 // pred_check
      _
    $region19: #{tpu_custom_call.1} parent=1 // pred_check_branch
      %107 = sbr.rel (0) target = $region21
    $region20: #{tpu_custom_call.1} parent=1 // pred_region
      %s109 = ssub.s32 128, 128
      %110 = vsyncadd [#allocation4], %s109
      %s111 = sshll.u32 [#allocation7], 4
      %s112 = int_to_ptr.vmem [resolvable:$true] %s111
      %117 = dma.vmem_to_hbm [thread:$0]  %s112, 128, %s2, [#allocation4], 64, 64, 4
    $region21: #{tpu_custom_call.1} parent=1 // pred_fallthru
      _
    // Predicated region
    $region22: #{tpu_custom_call.1} parent=1 // pred_check
      _
    $region23: #{tpu_custom_call.1} parent=1 // pred_check_branch
      %119 = sbr.rel (0) target = $region25
    $region24: #{tpu_custom_call.1} parent=1 // pred_region
      %120 = dma.done [#allocation4], 128
    $region25: #{tpu_custom_call.1} parent=1 // pred_fallthru
      _
    %121 = vsyncpa [#allocation3], 1
    %122 = vsyncpa [#allocation6], 1
    %123 = vsyncpa [#allocation4], 1

</llo_original>
